<compile_context>
chip_gen: v7x
topology: tpu7x:2x2x1
jax: 0.10.0
libtpu: 0.0.40
codegen_flags: <defaults>
</compile_context>

<pallas_src>
import jax
import jax.numpy as jnp
from jax.experimental import pallas as pl
from jax.experimental.pallas import tpu as pltpu


def _affine_const_kernel(x_ref, s_ref, t_ref, z_ref):
    # x_ref/z_ref: (TM, Dp), s_ref/t_ref: (1, Dp)
    es = jnp.exp(s_ref[...])                      # EUP, one push per tile
    z_ref[...] = x_ref[...] * es + t_ref[...]     # VPU, broadcast over batch


def affine_constant_flow_forward(x, s, t, *, target_block_bytes=2 * 1024 * 1024):
    """Forward pass of AffineConstantFlow.

    Args:
      x: (N, dim) float32
      s: (1, dim) float32  (scale log-parameter)
      t: (1, dim) float32  (shift parameter)
      target_block_bytes: approximate size of one x block in VMEM (per buffer).
    Returns:
      z: (N, dim) float32,  z = x * exp(s) + t
      log_det: (1,) float32, sum(s, axis=1)   (matches PyTorch shape quirk)
    """
    n, d = x.shape

    # --- lane-dense packing for small feature dims -------------------------
    pack = 1
    if d % 128 != 0 and 128 % d == 0:
        p = 128 // d
        if n % p == 0:
            pack = p

    if pack > 1:
        xk = x.reshape(n // pack, pack * d)
        sk = jnp.tile(s, (1, pack))
        tk = jnp.tile(t, (1, pack))
    else:
        xk, sk, tk = x, s, t

    rows, dp = xk.shape

    # --- batch tile size: ~target_block_bytes per block, multiple of 8 -----
    bytes_per_row = dp * x.dtype.itemsize
    rows_per_block = max(1, target_block_bytes // bytes_per_row)
    if rows_per_block >= rows:
        tm = rows                       # single block == full extent (always legal)
    else:
        tm = max(8, (rows_per_block // 8) * 8)
        tm = min(tm, rows)

    grid = (pl.cdiv(rows, tm),)

    zk = pl.pallas_call(
        _affine_const_kernel,
        out_shape=jax.ShapeDtypeStruct((rows, dp), x.dtype),
        grid=grid,
        in_specs=[
            pl.BlockSpec((tm, dp), lambda i: (i, 0)),   # x: tiled over batch
            pl.BlockSpec((1, dp), lambda i: (0, 0)),    # s: same block every step
            pl.BlockSpec((1, dp), lambda i: (0, 0)),    # t: same block every step
        ],
        out_specs=pl.BlockSpec((tm, dp), lambda i: (i, 0)),
        compiler_params=pltpu.CompilerParams(
            dimension_semantics=("parallel",)
        ),
    )(xk, sk, tk)

    z = zk.reshape(n, d)
    # Trivial (1, dim) reduction done in the wrapper; keeps the kernel's grid
    # loop free of a revisited (1, 1) output block.
    log_det = jnp.sum(s, axis=1)        # shape (1,)
    return z, log_det


if __name__ == "__main__":
    key = jax.random.PRNGKey(0)

    # --- case 1: module-consistent small shapes (batch=8, dim=32) ----------
    N, DIM = 8, 32
    kx, ks, kt = jax.random.split(key, 3)
    x = jax.random.normal(kx, (N, DIM), dtype=jnp.float32)
    s = jax.random.normal(ks, (1, DIM), dtype=jnp.float32)   # torch.randn(1, dim) analogue
    t = jax.random.normal(kt, (1, DIM), dtype=jnp.float32)

    z, log_det = affine_constant_flow_forward(x, s, t)
    jax.block_until_ready((z, log_det))

    z_ref = x * jnp.exp(s) + t
    ld_ref = jnp.sum(s, axis=1)
    assert z.shape == (N, DIM) and log_det.shape == (1,)
    assert jnp.allclose(z, z_ref, atol=1e-5, rtol=1e-5)
    assert jnp.allclose(log_det, ld_ref, atol=1e-5, rtol=1e-5)

    # --- case 2: non-packable dim + multi-block grid (incl. partial block) --
    N2, DIM2 = 72, 48
    kx2, ks2, kt2 = jax.random.split(jax.random.PRNGKey(1), 3)
    x2 = jax.random.normal(kx2, (N2, DIM2), dtype=jnp.float32)
    s2 = jax.random.normal(ks2, (1, DIM2), dtype=jnp.float32)
    t2 = jax.random.normal(kt2, (1, DIM2), dtype=jnp.float32)

    z2, log_det2 = affine_constant_flow_forward(
        x2, s2, t2, target_block_bytes=4096)  # forces a tiled grid in the test
    jax.block_until_ready((z2, log_det2))

    assert z2.shape == (N2, DIM2) and log_det2.shape == (1,)
    assert jnp.allclose(z2, x2 * jnp.exp(s2) + t2, atol=1e-5, rtol=1e-5)
    assert jnp.allclose(log_det2, jnp.sum(s2, axis=1), atol=1e-5, rtol=1e-5)

    print("KERNEL_OK")
</pallas_src>

<mosaic_0001>
module attributes {stable_mosaic.version = 11 : i64} {
  func.func @_affine_const_kernel(%arg0: i32, %arg1: memref<2x128xf32, #tpu.memory_space<vmem>>, %arg2: memref<1x128xf32, #tpu.memory_space<vmem>>, %arg3: memref<1x128xf32, #tpu.memory_space<vmem>>, %arg4: memref<2x128xf32, #tpu.memory_space<vmem>>) attributes {dimension_semantics = [#tpu.dimension_semantics<parallel>], iteration_bounds = array<i64: 1>, scalar_prefetch = 0 : i64, scratch_operands = 0 : i64, tpu.core_type = #tpu.core_type<tc>, window_params = [{transform_indices = @transform_0, window_bounds = array<i64: 2, 128>}, {pipeline_mode = #tpu.pipeline_mode<synchronous>, transform_indices = @transform_1, window_bounds = array<i64: 1, 128>}, {pipeline_mode = #tpu.pipeline_mode<synchronous>, transform_indices = @transform_2, window_bounds = array<i64: 1, 128>}, {transform_indices = @transform_3, window_bounds = array<i64: 2, 128>}]} {
    %c0 = arith.constant 0 : index
    %c0_0 = arith.constant 0 : index
    %0 = vector.load %arg2[%c0, %c0_0] : memref<1x128xf32, #tpu.memory_space<vmem>>, vector<1x128xf32>
    %1 = math.exp %0 : vector<1x128xf32>
    %c0_1 = arith.constant 0 : index
    %c0_2 = arith.constant 0 : index
    %2 = vector.load %arg1[%c0_1, %c0_2] : memref<2x128xf32, #tpu.memory_space<vmem>>, vector<2x128xf32>
    %3 = vector.broadcast %1 : vector<1x128xf32> to vector<2x128xf32>
    %4 = arith.mulf %2, %3 : vector<2x128xf32>
    %c0_3 = arith.constant 0 : index
    %c0_4 = arith.constant 0 : index
    %5 = vector.load %arg3[%c0_3, %c0_4] : memref<1x128xf32, #tpu.memory_space<vmem>>, vector<1x128xf32>
    %6 = vector.broadcast %5 : vector<1x128xf32> to vector<2x128xf32>
    %7 = arith.addf %4, %6 : vector<2x128xf32>
    %c0_5 = arith.constant 0 : index
    %c0_6 = arith.constant 0 : index
    %8 = vector.load %arg4[%c0_5, %c0_6] : memref<2x128xf32, #tpu.memory_space<vmem>>, vector<2x128xf32>
    tpu.vector_store %arg4[%c0_5, %c0_6], %7 {strides = array<i32>} : memref<2x128xf32, #tpu.memory_space<vmem>>, vector<2x128xf32>,
    return
  }
  func.func @transform_0(%arg0: i32) -> (i32, i32) {
    %c0_i32 = arith.constant 0 : i32
    %c0_i32_0 = arith.constant 0 : i32
    return %arg0, %c0_i32 : i32, i32
  }
  func.func @transform_1(%arg0: i32) -> (i32, i32) {
    %c0_i32 = arith.constant 0 : i32
    %c0_i32_0 = arith.constant 0 : i32
    %c0_i32_1 = arith.constant 0 : i32
    return %c0_i32, %c0_i32_0 : i32, i32
  }
  func.func @transform_2(%arg0: i32) -> (i32, i32) {
    %c0_i32 = arith.constant 0 : i32
    %c0_i32_0 = arith.constant 0 : i32
    %c0_i32_1 = arith.constant 0 : i32
    return %c0_i32, %c0_i32_0 : i32, i32
  }
  func.func @transform_3(%arg0: i32) -> (i32, i32) {
    %c0_i32 = arith.constant 0 : i32
    %c0_i32_0 = arith.constant 0 : i32
    return %arg0, %c0_i32 : i32, i32
  }
}

</mosaic_0001>

<llo_original>
// kernel: tpu_custom_call.1
$region0: #{tpu_custom_call.1}
  #allocation0 [shape = 'u32[]', space=smem, size = 0x4, offset = 0x4, fixed_abs, tag = 'smem constant byte address 0x4 - core index']
  #allocation1 [shape = 'u32[144,128]{1,0:T(1,128)}', space=vmem, size = 0x12000, scoped, tag = 'internal scratch']
  %s0 = inlined_call_operand.hbm [shape: f32[2,128], index: 0, kind: input, shape index: {}]
  %s1 = inlined_call_operand.vmem [shape: f32[1,128], index: 1, kind: input, shape index: {}]
  %s2 = inlined_call_operand.vmem [shape: f32[1,128], index: 2, kind: input, shape index: {}]
  %s3 = inlined_call_operand.hbm [shape: f32[2,128], index: 3, kind: output, shape index: {}]
  %s4 = sld [smem:[#allocation0]]
  $region26: #{tpu_custom_call.1} parent=0
    _
  %s6 = ssub.s32 1, %s4
  %s7 = scalar_select 0, %s6, %s4
  $region1: #{tpu_custom_call.1} parent=0
    #allocation2 [shape = 'u8[1024]{0}', space=vmem, size = 0x400, scoped, tag = 'input window, operand 0, single buffered']
    #allocation3 [shape = 's32[1]{0}', space=sflag, size = 0x4, scoped, tag = 'scoped memory for tpu_custom_call.1']
    #allocation4 [shape = 's32[1]{0}', space=sflag, size = 0x4, scoped, tag = 'scoped memory for tpu_custom_call.1']
    #allocation5 [shape = 'u8[1024]{0}', space=vmem, size = 0x400, scoped, tag = 'output window, operand 0, single buffered']
    %8 = vsyncpa [#allocation3], 0
    %9 = vsyncpa [#allocation4], 0
    // Predicated region
    $region2: #{tpu_custom_call.1} parent=1 // pred_check
      _
    $region3: #{tpu_custom_call.1} parent=1 // pred_check_branch
      %11 = sbr.rel (0) target = $region5
    $region4: #{tpu_custom_call.1} parent=1 // pred_region
      %s13 = ssub.s32 32, 32
      %14 = vsyncadd [#allocation3], %s13
      %s16 = sshll.u32 [#allocation2], 4
      %s17 = int_to_ptr.vmem [resolvable:$true] %s16
      %19 = dma.hbm_to_vmem [thread:$0]  %s0, 32, %s17, [#allocation3]
    $region5: #{tpu_custom_call.1} parent=1 // pred_fallthru
      _
    // Predicated region
    $region6: #{tpu_custom_call.1} parent=1 // pred_check
      _
    $region7: #{tpu_custom_call.1} parent=1 // pred_check_branch
      %21 = sbr.rel (0) target = $region9
    $region8: #{tpu_custom_call.1} parent=1 // pred_region
      _
    $region9: #{tpu_custom_call.1} parent=1 // pred_fallthru
      _
    // Predicated region
    $region10: #{tpu_custom_call.1} parent=1 // pred_check
      _
    $region11: #{tpu_custom_call.1} parent=1 // pred_check_branch
      %23 = sbr.rel (0) target = $region13
    $region12: #{tpu_custom_call.1} parent=1 // pred_region
      _
    $region13: #{tpu_custom_call.1} parent=1 // pred_fallthru
      _
    // Predicated region
    $region14: #{tpu_custom_call.1} parent=1 // pred_check
      _
    $region15: #{tpu_custom_call.1} parent=1 // pred_check_branch
      %25 = sbr.rel (0) target = $region17
    $region16: #{tpu_custom_call.1} parent=1 // pred_region
      %26 = dma.done [#allocation3], 32
    $region17: #{tpu_custom_call.1} parent=1 // pred_fallthru
      _
    %v27 = vld [vmem:[%s1] sm:$0x1]
    %v28 = vmul.f32 %v27, 1.442695
    %v29 = vpow.pop %v28
    %v30 = vld [vmem:[#allocation2] sm:$0x3]
    %v32 = vlaneseq
    %v33 = vshrl.u32 %v32, 7
    %v34 = vsub.s32 0, %v33
    %v35 = vrot.slane %v29, %v34
    %v37 = vmul.f32 %v30, %v35
    %v38 = vld [vmem:[%s2] sm:$0x1]
    %v40 = vlaneseq
    %v41 = vshrl.u32 %v40, 7
    %v42 = vsub.s32 0, %v41
    %v43 = vrot.slane %v38, %v42
    %v45 = vadd.f32 %v37, %v43
    %46 = vst [vmem:[#allocation5] sm:$0x3] %v45
    // Predicated region
    $region18: #{tpu_custom_call.1} parent=1 // pred_check
      _
    $region19: #{tpu_custom_call.1} parent=1 // pred_check_branch
      %48 = sbr.rel (0) target = $region21
    $region20: #{tpu_custom_call.1} parent=1 // pred_region
      %s50 = ssub.s32 32, 32
      %51 = vsyncadd [#allocation4], %s50
      %s53 = sshll.u32 [#allocation5], 4
      %s54 = int_to_ptr.vmem [resolvable:$true] %s53
      %56 = dma.vmem_to_hbm [thread:$0]  %s54, 32, %s3, [#allocation4]
    $region21: #{tpu_custom_call.1} parent=1 // pred_fallthru
      _
    // Predicated region
    $region22: #{tpu_custom_call.1} parent=1 // pred_check
      _
    $region23: #{tpu_custom_call.1} parent=1 // pred_check_branch
      %58 = sbr.rel (0) target = $region25
    $region24: #{tpu_custom_call.1} parent=1 // pred_region
      %59 = dma.done [#allocation4], 32
    $region25: #{tpu_custom_call.1} parent=1 // pred_fallthru
      _
    %60 = vsyncpa [#allocation3], 1
    %61 = vsyncpa [#allocation4], 1

</llo_original>
